<compile_context>
chip_gen: v6e
topology: v6e:2x2x1
jax: 0.10.0
libtpu: 0.0.40
codegen_flags: <defaults>
</compile_context>

<pallas_src>
import functools

import jax
import jax.numpy as jnp
from jax.experimental import pallas as pl
from jax.experimental.pallas import tpu as pltpu

_EPS = 1e-12  # F.normalize default eps

_TARGET_BLOCK_BYTES = 1 * 1024 * 1024  # per-input VMEM block target (~1 MiB)
_MIN_ROWS_PER_SHARD = 1024             # don't shard tiny problems across cores
_DEFAULT_VMEM_LIMIT = 32 * 1024 * 1024


def _cdiv(a, b):
    return (a + b - 1) // b


def _round_up(a, b):
    return _cdiv(a, b) * b


def _num_tensorcores():
    """Best-effort TensorCore count (1 on v5e/v6e, 2 on v7x); safe fallback 1."""
    get_info = getattr(pltpu, "get_tpu_info", None)
    if get_info is not None:
        try:
            info = get_info()
            for name in ("num_cores", "num_tensorcores", "tensorcores_per_chip",
                         "core_count"):
                n = getattr(info, name, None)
                if isinstance(n, int) and 1 <= n <= 8:
                    return n
        except Exception:
            pass
    return 1


def _vmem_limit_bytes():
    """Scoped VMEM cap: 32 MiB, but never more than half of physical VMEM."""
    get_info = getattr(pltpu, "get_tpu_info", None)
    if get_info is not None:
        try:
            cap = getattr(get_info(), "vmem_capacity_bytes", None)
            if isinstance(cap, int) and cap > 0:
                return min(_DEFAULT_VMEM_LIMIT, cap // 2)
        except Exception:
            pass
    return _DEFAULT_VMEM_LIMIT


def _static_pow(x, beta):
    """x ** beta for x >= 0, specialized on the static Python float beta."""
    if beta == 1.0:
        return x
    if beta == 0.5:
        return jnp.sqrt(x)          # 1 EUP op instead of exp+log
    if beta == 2.0:
        return x * x
    # Generic fallback: guard x == 0 so exp(beta*log(0)) cannot produce NaN/junk.
    return jnp.where(x > 0, jnp.power(x, beta), 0.0)


def _merit_loss_kernel(x_ref, t_ref, o_ref, *, beta, row_tile,
                       binary_targets, approx_recip):
    """Accumulate un-normalized loss partials into an (8, C) resident block.

    Grid = (shard, row-tile-within-shard); the second axis is the reduction
    ("arbitrary") axis, over which the output block is resident.
    """
    k = pl.program_id(1)

    @pl.when(k == 0)
    def _():
        o_ref[...] = jnp.zeros_like(o_ref)

    x = x_ref[...].astype(jnp.float32)
    t = t_ref[...].astype(jnp.float32)
    c = x.shape[-1]

    # Numerically stable log-softmax pieces (exp / log ride the EUP slot).
    m = jnp.max(x, axis=-1, keepdims=True)
    shifted = x - m
    ex = jnp.exp(shifted)
    denom = jnp.sum(ex, axis=-1, keepdims=True)
    logprobs = shifted - jnp.log(denom)

    # q_beta = (softmax * t)^beta / ||(softmax * t)^beta||_1
    #        = (ex * t)^beta / sum((ex * t)^beta)   (per-row factors cancel)
    w = ex * t
    wb = _static_pow(w, beta)
    n2 = jnp.maximum(jnp.sum(wb, axis=-1, keepdims=True), _EPS)
    if approx_recip:
        # Per-row scalar on the EUP; fold the loss negation into it.
        neg_scale = -pl.reciprocal(n2, approx=True)
    else:
        neg_scale = -(1.0 / n2)

    # loss = -q_beta * t * logprobs = (wb * neg_scale) * t * logprobs
    scaled = wb * neg_scale                         # (row_tile, C)
    if binary_targets:
        # t in {0,1}: wb is already exactly 0 where t == 0, so drop the `* t`.
        loss_tile = scaled * logprobs
    else:
        loss_tile = scaled * (t * logprobs)

    # Collapse the row tile to an (8, C) partial with VPU adds only; the
    # final cross-lane/cross-sublane reduce happens once in the wrapper.
    if row_tile == 8:
        o_ref[...] += loss_tile
    else:
        o_ref[...] += jnp.sum(loss_tile.reshape(row_tile // 8, 8, c), axis=0)


def _choose_tiling(N, C, itemsize, max_row_shards):
    # Cap each input block at ~1 MiB (of the *input* dtype) and keep it a
    # multiple of 8 rows.
    row_cap = max(8, ((_TARGET_BLOCK_BYTES // (C * itemsize)) // 8) * 8)
    num_shards = max(1, min(max_row_shards, _cdiv(N, _MIN_ROWS_PER_SHARD)))
    per_shard = _cdiv(N, num_shards)
    steps = _cdiv(per_shard, row_cap)
    row_tile = _round_up(_cdiv(per_shard, steps), 8)
    return num_shards, steps, row_tile


def meritocratic_loss(inputs, targets, beta=0.5, *, max_row_shards=None,
                      assume_binary_targets=False, approx_recip=True):
    assert inputs.ndim == 2 and inputs.shape == targets.shape
    N, C = inputs.shape
    if max_row_shards is None:
        max_row_shards = _num_tensorcores()
    itemsize = jnp.dtype(inputs.dtype).itemsize
    num_shards, steps, row_tile = _choose_tiling(N, C, itemsize, max_row_shards)

    padded_N = num_shards * steps * row_tile
    if padded_N != N:
        pad = padded_N - N
        # Zero-padded targets make padded rows contribute exactly 0.
        inputs = jnp.pad(inputs, ((0, pad), (0, 0)))
        targets = jnp.pad(targets, ((0, pad), (0, 0)))

    kernel = functools.partial(
        _merit_loss_kernel, beta=beta, row_tile=row_tile,
        binary_targets=assume_binary_targets, approx_recip=approx_recip)

    partials = pl.pallas_call(
        kernel,
        out_shape=jax.ShapeDtypeStruct((num_shards * 8, C), jnp.float32),
        grid_spec=pltpu.PrefetchScalarGridSpec(
            num_scalar_prefetch=0,
            grid=(num_shards, steps),
            in_specs=[
                pl.BlockSpec((row_tile, C), lambda p, k: (p * steps + k, 0)),
                pl.BlockSpec((row_tile, C), lambda p, k: (p * steps + k, 0)),
            ],
            out_specs=pl.BlockSpec((8, C), lambda p, k: (p, 0)),
        ),
        compiler_params=pltpu.CompilerParams(
            dimension_semantics=("parallel", "arbitrary"),
            vmem_limit_bytes=_vmem_limit_bytes(),
        ),
    )(inputs, targets)

    # Tiny final reduce + mean (over the ORIGINAL N*C) in plain XLA.
    return jnp.sum(partials) / (N * C)


def _ref_meritocratic_loss(inputs, targets, beta=0.5):
    """Pure-JAX reference mirroring the PyTorch module exactly."""
    softmax = jax.nn.softmax(inputs, axis=1)
    probs = softmax * targets
    n1 = jnp.maximum(jnp.sum(jnp.abs(probs), axis=1, keepdims=True), _EPS)
    q_mml = probs / n1
    q_beta = q_mml ** beta
    n2 = jnp.maximum(jnp.sum(jnp.abs(q_beta), axis=1, keepdims=True), _EPS)
    q_beta = q_beta / n2
    logprobs = jax.nn.log_softmax(inputs, axis=1)
    return jnp.mean(-q_beta * targets * logprobs)


if __name__ == "__main__":
    key = jax.random.PRNGKey(0)
    k1, k2 = jax.random.split(key)

    N, C = 8, 32  # batch=8, classes=32
    inputs = jax.random.normal(k1, (N, C), dtype=jnp.float32)
    # multi-hot non-negative targets (typical for this loss)
    targets = (jax.random.uniform(k2, (N, C)) > 0.5).astype(jnp.float32)

    ref = _ref_meritocratic_loss(inputs, targets, beta=0.5)

    # General path (exact spec semantics for any non-negative targets).
    loss = meritocratic_loss(inputs, targets, beta=0.5)
    loss = jax.block_until_ready(loss)
    assert jnp.allclose(loss, ref, rtol=5e-3, atol=1e-6), (loss, ref)

    # Fast path for {0,1} multi-hot targets (drops the redundant `* t`).
    loss_bin = meritocratic_loss(inputs, targets, beta=0.5,
                                 assume_binary_targets=True)
    loss_bin = jax.block_until_ready(loss_bin)
    assert jnp.allclose(loss_bin, ref, rtol=5e-3, atol=1e-6), (loss_bin, ref)

    print("KERNEL_OK")
</pallas_src>

<mosaic_0001>
module attributes {stable_mosaic.version = 11 : i64} {
  func.func @_merit_loss_kernel(%arg0: i32, %arg1: i32, %arg2: memref<8x32xf32, #tpu.memory_space<vmem>>, %arg3: memref<8x32xf32, #tpu.memory_space<vmem>>, %arg4: memref<8x32xf32, #tpu.memory_space<vmem>>) attributes {dimension_semantics = [#tpu.dimension_semantics<parallel>, #tpu.dimension_semantics<arbitrary>], iteration_bounds = array<i64: 1, 1>, scalar_prefetch = 0 : i64, scratch_operands = 0 : i64, tpu.core_type = #tpu.core_type<tc>, window_params = [{transform_indices = @transform_0, window_bounds = array<i64: 8, 32>}, {transform_indices = @transform_1, window_bounds = array<i64: 8, 32>}, {transform_indices = @transform_2, window_bounds = array<i64: 8, 32>}]} {
    %c0_i32 = arith.constant 0 : i32
    %0 = arith.cmpi eq, %arg1, %c0_i32 : i32
    %1 = arith.extui %0 : i1 to i32
    %c0_i32_0 = arith.constant 0 : i32
    %2 = arith.cmpi ne, %1, %c0_i32_0 : i32
    scf.if %2 {
      %cst_12 = arith.constant 0.000000e+00 : f32
      %31 = vector.broadcast %cst_12 : f32 to vector<8x32xf32>
      %c0_13 = arith.constant 0 : index
      %c0_14 = arith.constant 0 : index
      %32 = vector.load %arg4[%c0_13, %c0_14] : memref<8x32xf32, #tpu.memory_space<vmem>>, vector<8x32xf32>
      tpu.vector_store %arg4[%c0_13, %c0_14], %31 {strides = array<i32>} : memref<8x32xf32, #tpu.memory_space<vmem>>, vector<8x32xf32>,
    } else {
    }
    %c0 = arith.constant 0 : index
    %c0_1 = arith.constant 0 : index
    %3 = vector.load %arg2[%c0, %c0_1] : memref<8x32xf32, #tpu.memory_space<vmem>>, vector<8x32xf32>
    %c0_2 = arith.constant 0 : index
    %c0_3 = arith.constant 0 : index
    %4 = vector.load %arg3[%c0_2, %c0_3] : memref<8x32xf32, #tpu.memory_space<vmem>>, vector<8x32xf32>
    %cst = arith.constant dense<0xFF800000> : vector<8xf32>
    %5 = vector.multi_reduction <maximumf>, %3, %cst [1] : vector<8x32xf32> to vector<8xf32>
    %6 = vector.shape_cast %5 : vector<8xf32> to vector<8x1xf32>
    %7 = vector.broadcast %6 : vector<8x1xf32> to vector<8x32xf32>
    %8 = arith.subf %3, %7 : vector<8x32xf32>
    %9 = math.exp %8 : vector<8x32xf32>
    %cst_4 = arith.constant dense<0.000000e+00> : vector<8xf32>
    %10 = vector.multi_reduction <add>, %9, %cst_4 [1] : vector<8x32xf32> to vector<8xf32>
    %11 = vector.shape_cast %10 : vector<8xf32> to vector<8x1xf32>
    %12 = math.log %11 : vector<8x1xf32>
    %13 = vector.broadcast %12 : vector<8x1xf32> to vector<8x32xf32>
    %14 = arith.subf %8, %13 : vector<8x32xf32>
    %15 = arith.mulf %9, %4 : vector<8x32xf32>
    %16 = math.sqrt %15 : vector<8x32xf32>
    %cst_5 = arith.constant dense<0.000000e+00> : vector<8xf32>
    %17 = vector.multi_reduction <add>, %16, %cst_5 [1] : vector<8x32xf32> to vector<8xf32>
    %18 = vector.shape_cast %17 : vector<8xf32> to vector<8x1xf32>
    %cst_6 = arith.constant 9.99999996E-13 : f32
    %19 = vector.broadcast %cst_6 : f32 to vector<8x1xf32>
    %20 = arith.maximumf %18, %19 : vector<8x1xf32>
    %21 = tpu.reciprocal %20 {approx = true} : vector<8x1xf32> -> vector<8x1xf32>
    %cst_7 = arith.constant 0.000000e+00 : f32
    %22 = vector.broadcast %cst_7 : f32 to vector<8x1xf32>
    %23 = arith.subf %22, %21 : vector<8x1xf32>
    %24 = vector.broadcast %23 : vector<8x1xf32> to vector<8x32xf32>
    %25 = arith.mulf %16, %24 : vector<8x32xf32>
    %26 = arith.mulf %4, %14 : vector<8x32xf32>
    %27 = arith.mulf %25, %26 : vector<8x32xf32>
    %c0_8 = arith.constant 0 : index
    %c0_9 = arith.constant 0 : index
    %28 = vector.load %arg4[%c0_8, %c0_9] : memref<8x32xf32, #tpu.memory_space<vmem>>, vector<8x32xf32>
    %29 = arith.addf %28, %27 : vector<8x32xf32>
    %c0_10 = arith.constant 0 : index
    %c0_11 = arith.constant 0 : index
    %30 = vector.load %arg4[%c0_10, %c0_11] : memref<8x32xf32, #tpu.memory_space<vmem>>, vector<8x32xf32>
    tpu.vector_store %arg4[%c0_10, %c0_11], %29 {strides = array<i32>} : memref<8x32xf32, #tpu.memory_space<vmem>>, vector<8x32xf32>,
    return
  }
  func.func @transform_0(%arg0: i32, %arg1: i32) -> (i32, i32) {
    %c1_i32 = arith.constant 1 : i32
    %0 = arith.muli %arg0, %c1_i32 : i32
    %1 = arith.addi %0, %arg1 : i32
    %c0_i32 = arith.constant 0 : i32
    %c0_i32_0 = arith.constant 0 : i32
    return %1, %c0_i32 : i32, i32
  }
  func.func @transform_1(%arg0: i32, %arg1: i32) -> (i32, i32) {
    %c1_i32 = arith.constant 1 : i32
    %0 = arith.muli %arg0, %c1_i32 : i32
    %1 = arith.addi %0, %arg1 : i32
    %c0_i32 = arith.constant 0 : i32
    %c0_i32_0 = arith.constant 0 : i32
    return %1, %c0_i32 : i32, i32
  }
  func.func @transform_2(%arg0: i32, %arg1: i32) -> (i32, i32) {
    %c0_i32 = arith.constant 0 : i32
    %c0_i32_0 = arith.constant 0 : i32
    return %arg0, %c0_i32 : i32, i32
  }
}

</mosaic_0001>

<llo_original>
// kernel: tpu_custom_call.1
$region0: #{tpu_custom_call.1}
  #allocation0 [shape = 'u32[]', space=smem, size = 0x4, offset = 0x4, fixed_abs, tag = 'smem constant byte address 0x4 - core index']
  #allocation1 [shape = 'u32[144,128]{1,0:T(1,128)}', space=vmem, size = 0x12000, scoped, tag = 'internal scratch']
  %s0 = inlined_call_operand.hbm [shape: f32[8,32], index: 0, kind: input, shape index: {}]
  %s1 = inlined_call_operand.hbm [shape: f32[8,32], index: 1, kind: input, shape index: {}]
  %s2 = inlined_call_operand.hbm [shape: f32[8,32], index: 2, kind: output, shape index: {}]
  %s3 = sld [smem:[#allocation0]]
  $region30: #{tpu_custom_call.1} parent=0
    _
  %s5 = ssub.s32 1, %s3
  %s6 = scalar_select 0, %s5, %s3
  $region1: #{tpu_custom_call.1} parent=0
    #allocation2 [shape = 'u8[4096]{0}', space=vmem, size = 0x1000, scoped, tag = 'input window, operand 0, single buffered']
    #allocation3 [shape = 's32[1]{0}', space=sflag, size = 0x4, scoped, tag = 'scoped memory for tpu_custom_call.1']
    #allocation4 [shape = 's32[1]{0}', space=sflag, size = 0x4, scoped, tag = 'scoped memory for tpu_custom_call.1']
    #allocation5 [shape = 'u8[4096]{0}', space=vmem, size = 0x1000, scoped, tag = 'input window, operand 1, single buffered']
    #allocation6 [shape = 's32[1]{0}', space=sflag, size = 0x4, scoped, tag = 'scoped memory for tpu_custom_call.1']
    #allocation7 [shape = 'u8[4096]{0}', space=vmem, size = 0x1000, scoped, tag = 'output window, operand 0, single buffered']
    %7 = vsyncpa [#allocation3], 0
    %8 = vsyncpa [#allocation6], 0
    %9 = vsyncpa [#allocation4], 0
    // Predicated region
    $region2: #{tpu_custom_call.1} parent=1 // pred_check
      _
    $region3: #{tpu_custom_call.1} parent=1 // pred_check_branch
      %11 = sbr.rel (0) target = $region5
    $region4: #{tpu_custom_call.1} parent=1 // pred_region
      %s12 = sadd.s32 0, 0
      %s14 = ssub.s32 128, 128
      %15 = vsyncadd [#allocation3], %s14
      %s16 = smul.addr %s12, 128
      %s17 = scalar_lea.hbm %s0, %s16
      %s19 = sshll.u32 [#allocation2], 4
      %s20 = int_to_ptr.vmem [resolvable:$true] %s19
      %22 = dma.hbm_to_vmem [thread:$0]  %s17, 128, %s20, [#allocation3]
    $region5: #{tpu_custom_call.1} parent=1 // pred_fallthru
      _
    // Predicated region
    $region6: #{tpu_custom_call.1} parent=1 // pred_check
      _
    $region7: #{tpu_custom_call.1} parent=1 // pred_check_branch
      %24 = sbr.rel (0) target = $region9
    $region8: #{tpu_custom_call.1} parent=1 // pred_region
      %s25 = sadd.s32 0, 0
      %s27 = ssub.s32 128, 128
      %28 = vsyncadd [#allocation6], %s27
      %s29 = smul.addr %s25, 128
      %s30 = scalar_lea.hbm %s1, %s29
      %s32 = sshll.u32 [#allocation5], 4
      %s33 = int_to_ptr.vmem [resolvable:$true] %s32
      %35 = dma.hbm_to_vmem [thread:$0]  %s30, 128, %s33, [#allocation6]
    $region9: #{tpu_custom_call.1} parent=1 // pred_fallthru
      _
    // Predicated region
    $region10: #{tpu_custom_call.1} parent=1 // pred_check
      _
    $region11: #{tpu_custom_call.1} parent=1 // pred_check_branch
      %37 = sbr.rel (0) target = $region13
    $region12: #{tpu_custom_call.1} parent=1 // pred_region
      %38 = dma.done [#allocation3], 128
    $region13: #{tpu_custom_call.1} parent=1 // pred_fallthru
      _
    // Predicated region
    $region14: #{tpu_custom_call.1} parent=1 // pred_check
      _
    $region15: #{tpu_custom_call.1} parent=1 // pred_check_branch
      %40 = sbr.rel (0) target = $region17
    $region16: #{tpu_custom_call.1} parent=1 // pred_region
      %41 = dma.done [#allocation6], 128
    $region17: #{tpu_custom_call.1} parent=1 // pred_fallthru
      _
    %s42 = sadd.s32 0, 0
    %s43 = sadd.s32 0, 0
    %p44 = scmp.eq.s32.totalorder 0, 0
    // Predicated region
    $region18: #{tpu_custom_call.1} parent=1 // pred_check
      %p45 = pneg %p44
    $region19: #{tpu_custom_call.1} parent=1 // pred_check_branch
      %47 = sbr.rel (%p45) target = $region21
    $region20: #{tpu_custom_call.1} parent=1 // pred_region
      %vm48 = vcmask 261120
      %49 = vst.msk [vmem:[#allocation7] sm:$0xff] %vm48, 0.0
    $region21: #{tpu_custom_call.1} parent=1 // pred_fallthru
      _
    %v50 = vld [vmem:[#allocation2] sm:$0xff]
    %v51 = vld [vmem:[#allocation5] sm:$0xff]
    %vm52 = vcmask 261120
    %v53 = vsel %vm52, %v50, -inf
    %54 = vmax.xlane.f32.xlu0 %v53
    %v55 = vpop.xlane.xlu0 %54
    %v56 = vsub.f32 %v50, %v55
    %v57 = vmul.f32 %v56, 1.442695
    %v58 = vpow.pop %v57
    %v59 = vsel %vm52, %v58, 0.0
    %60 = vadd.xlane.f32.xlu0 %v59
    %v61 = vpop.xlane.xlu0 %60
    %v62 = vlog2.pop %v61
    %v63 = vmul.f32 %v62, 0.6931472
    %v64 = vsub.f32 %v56, %v63
    %v65 = vmul.f32 %v58, %v51
    %v66 = vrsqrt.pop %v65
    %v67 = vmul.f32 %v65, %v66
    %vm68 = vcmp.eq.f32.partialorder %v65, inf
    %v69 = vsel %vm68, %v65, %v67
    %vm70 = vcmp.eq.f32.partialorder %v65, 0.0
    %v71 = vand.u32 %v65, 2147483648
    %v72 = vsel %vm70, %v71, %v69
    %v73 = vsel %vm52, %v72, 0.0
    %74 = vadd.xlane.f32.xlu0 %v73
    %v75 = vpop.xlane.xlu0 %74
    %v76 = vmax.f32 %v75, 1e-12
    %v77 = vrcp.pop %v76
    %v78 = vsub.f32 0.0, %v77
    %v79 = vmul.f32 %v72, %v78
    %v80 = vmul.f32 %v51, %v64
    %v81 = vmul.f32 %v79, %v80
    %v82 = vld [vmem:[#allocation7] sm:$0xff]
    %v83 = vadd.f32 %v82, %v81
    %84 = vst.msk [vmem:[#allocation7] sm:$0xff] %vm52, %v83
    // Predicated region
    $region22: #{tpu_custom_call.1} parent=1 // pred_check
      _
    $region23: #{tpu_custom_call.1} parent=1 // pred_check_branch
      %86 = sbr.rel (0) target = $region25
    $region24: #{tpu_custom_call.1} parent=1 // pred_region
      %s88 = ssub.s32 128, 128
      %89 = vsyncadd [#allocation4], %s88
      %s91 = sshll.u32 [#allocation7], 4
      %s92 = int_to_ptr.vmem [resolvable:$true] %s91
      %94 = dma.vmem_to_hbm [thread:$0]  %s92, 128, %s2, [#allocation4]
    $region25: #{tpu_custom_call.1} parent=1 // pred_fallthru
      _
    // Predicated region
    $region26: #{tpu_custom_call.1} parent=1 // pred_check
      _
    $region27: #{tpu_custom_call.1} parent=1 // pred_check_branch
      %96 = sbr.rel (0) target = $region29
    $region28: #{tpu_custom_call.1} parent=1 // pred_region
      %97 = dma.done [#allocation4], 128
    $region29: #{tpu_custom_call.1} parent=1 // pred_fallthru
      _
    %98 = vsyncpa [#allocation3], 1
    %99 = vsyncpa [#allocation6], 1
    %100 = vsyncpa [#allocation4], 1

</llo_original>
